<compile_context>
chip_gen: v5e
topology: v5e:2x2
jax: 0.10.0
libtpu: 0.0.40
codegen_flags: <defaults>
</compile_context>

<pallas_src>
import jax
import jax.numpy as jnp
from jax import lax
from jax.experimental import pallas as pl
from jax.experimental.pallas import tpu as pltpu

LANES = 128
SUBLANES = 8  # f32 accumulator sublanes


def _round_up(x, m):
    return ((x + m - 1) // m) * m


def _sublane_multiple(dtype):
    # Minimum second-to-last block dim by dtype packing: f32 -> 8, bf16 -> 16, 8-bit -> 32.
    return {4: 8, 2: 16, 1: 32}[jnp.dtype(dtype).itemsize]


def _make_rmsle_kernel(tile_rows, rows, steps):
    """Accumulate sum((log1p(p) - log1p(t))^2) into a resident (8, 128) f32 block."""
    needs_mask = rows < steps * tile_rows  # static: is the last block partial?

    def kernel(p_ref, t_ref, o_ref):
        i = pl.program_id(0)

        @pl.when(i == 0)
        def _init():
            o_ref[...] = jnp.zeros_like(o_ref)

        p = p_ref[...].astype(jnp.float32)
        t = t_ref[...].astype(jnp.float32)
        d = jnp.log1p(p) - jnp.log1p(t)
        sq = d * d

        def _accumulate(x):
            # (tile_rows, 128) -> (tile_rows//8, 8, 128); summing the leading axis
            # is pure vreg-wise VPU adds into the resident accumulator.
            o_ref[...] += jnp.sum(x.reshape(-1, SUBLANES, LANES), axis=0)

        if needs_mask:
            is_last = i == steps - 1

            @pl.when(jnp.logical_not(is_last))
            def _full_tile():
                _accumulate(sq)

            @pl.when(is_last)
            def _partial_tile():
                # Rows >= `rows` in the final tile are out-of-bounds garbage from the
                # partial-block DMA; zero them.  jnp.where discards any NaN/Inf that
                # log1p may have produced on the garbage (unselected) rows.
                row = lax.broadcasted_iota(jnp.int32, sq.shape, 0) + i * tile_rows
                _accumulate(jnp.where(row < rows, sq, 0.0))
        else:
            _accumulate(sq)

    return kernel


def rmsle_loss(predict, target, *, tile_rows=4096):
    """sqrt(mean((log1p(predict) - log1p(target))**2)) computed with a Pallas kernel."""
    assert predict.shape == target.shape, "predict/target must match"
    total = predict.size
    assert total > 0

    p = predict.reshape(-1)
    t = target.reshape(-1)

    # Lane-align the flat length.  For size % 128 == 0 (the common case, incl. the
    # test below) the reshape is a no-copy metadata op; otherwise pad < 128 zeros
    # (log1p(0) - log1p(0) == 0, so the pad contributes nothing to the sum).
    rows = pl.cdiv(total, LANES)
    padded = rows * LANES
    if padded != total:
        p = jnp.pad(p, (0, padded - total))
        t = jnp.pad(t, (0, padded - total))
    p2 = p.reshape(rows, LANES)
    t2 = t.reshape(rows, LANES)

    # Tile height: multiple of the dtype-dependent sublane packing, no larger than needed.
    sub = max(_sublane_multiple(p2.dtype), _sublane_multiple(t2.dtype))
    tile_rows_eff = min(_round_up(tile_rows, sub), _round_up(rows, sub))
    steps = pl.cdiv(rows, tile_rows_eff)  # == 1 for small inputs (fast path)

    # Scoped-VMEM budget sized to need: 2 inputs x 2 pipeline buffers + headroom for
    # the in-kernel f32 intermediates + slack (don't over-reserve, esp. on v7x).
    in_tile_bytes = tile_rows_eff * LANES * (p2.dtype.itemsize + t2.dtype.itemsize)
    f32_tile_bytes = tile_rows_eff * LANES * 4
    vmem_bytes = 2 * in_tile_bytes + 6 * f32_tile_bytes + (4 << 20)

    partial = pl.pallas_call(
        _make_rmsle_kernel(tile_rows_eff, rows, steps),
        out_shape=jax.ShapeDtypeStruct((SUBLANES, LANES), jnp.float32),
        grid_spec=pltpu.PrefetchScalarGridSpec(
            num_scalar_prefetch=0,
            grid=(steps,),
            in_specs=[
                pl.BlockSpec((tile_rows_eff, LANES), lambda i: (i, 0)),
                pl.BlockSpec((tile_rows_eff, LANES), lambda i: (i, 0)),
            ],
            # One resident lane-dense (8, 128) accumulator block for the whole grid.
            out_specs=pl.BlockSpec((SUBLANES, LANES), lambda i: (0, 0)),
        ),
        compiler_params=pltpu.CompilerParams(
            dimension_semantics=("arbitrary",),  # reduction axis with resident output
            vmem_limit_bytes=vmem_bytes,
        ),
        cost_estimate=pl.CostEstimate(
            flops=3 * rows * LANES,
            transcendentals=2 * rows * LANES,
            bytes_accessed=rows * LANES * (p2.dtype.itemsize + t2.dtype.itemsize),
        ),
    )(p2, t2)

    # Tiny finalize in the wrapper: reduce the (8,128) partials, divide by the TRUE
    # element count (not the padded one), sqrt.
    return jnp.sqrt(jnp.sum(partial) / total)


if __name__ == "__main__":
    # Small NCHW-style shapes consistent with the prediction module.
    B, C, H, W = 2, 4, 16, 16
    key = jax.random.PRNGKey(0)
    kp, kt = jax.random.split(key)
    # Nonnegative values (RMSLE operates on log1p of nonnegative predictions).
    predict = jax.random.uniform(kp, (B, C, H, W), jnp.float32, 0.0, 5.0)
    target = jax.random.uniform(kt, (B, C, H, W), jnp.float32, 0.0, 5.0)

    loss = jax.jit(rmsle_loss)(predict, target)
    jax.block_until_ready(loss)

    # Pure-JAX reference check.
    ref = jnp.sqrt(jnp.mean((jnp.log1p(predict) - jnp.log1p(target)) ** 2))
    assert jnp.allclose(loss, ref, rtol=1e-5, atol=1e-6), (loss, ref)

    print("KERNEL_OK")
</pallas_src>

<mosaic_0001>
module attributes {stable_mosaic.version = 11 : i64} {
  func.func @kernel(%arg0: i32, %arg1: memref<16x128xf32, #tpu.memory_space<vmem>>, %arg2: memref<16x128xf32, #tpu.memory_space<vmem>>, %arg3: memref<8x128xf32, #tpu.memory_space<vmem>>) attributes {dimension_semantics = [#tpu.dimension_semantics<arbitrary>], iteration_bounds = array<i64: 1>, scalar_prefetch = 0 : i64, scratch_operands = 0 : i64, tpu.core_type = #tpu.core_type<tc>, window_params = [{transform_indices = @transform_0, window_bounds = array<i64: 16, 128>}, {transform_indices = @transform_1, window_bounds = array<i64: 16, 128>}, {pipeline_mode = #tpu.pipeline_mode<synchronous>, transform_indices = @transform_2, window_bounds = array<i64: 8, 128>}]} {
    %c0_i32 = arith.constant 0 : i32
    %0 = arith.cmpi eq, %arg0, %c0_i32 : i32
    %1 = arith.extui %0 : i1 to i32
    %c0_i32_0 = arith.constant 0 : i32
    %2 = arith.cmpi ne, %1, %c0_i32_0 : i32
    scf.if %2 {
      %cst_8 = arith.constant 0.000000e+00 : f32
      %14 = vector.broadcast %cst_8 : f32 to vector<8x128xf32>
      %c0_9 = arith.constant 0 : index
      %c0_10 = arith.constant 0 : index
      %15 = vector.load %arg3[%c0_9, %c0_10] : memref<8x128xf32, #tpu.memory_space<vmem>>, vector<8x128xf32>
      tpu.vector_store %arg3[%c0_9, %c0_10], %14 {strides = array<i32>} : memref<8x128xf32, #tpu.memory_space<vmem>>, vector<8x128xf32>,
    } else {
    }
    %c0 = arith.constant 0 : index
    %c0_1 = arith.constant 0 : index
    %3 = vector.load %arg1[%c0, %c0_1] : memref<16x128xf32, #tpu.memory_space<vmem>>, vector<16x128xf32>
    %c0_2 = arith.constant 0 : index
    %c0_3 = arith.constant 0 : index
    %4 = vector.load %arg2[%c0_2, %c0_3] : memref<16x128xf32, #tpu.memory_space<vmem>>, vector<16x128xf32>
    %5 = math.log1p %3 : vector<16x128xf32>
    %6 = math.log1p %4 : vector<16x128xf32>
    %7 = arith.subf %5, %6 : vector<16x128xf32>
    %8 = arith.mulf %7, %7 : vector<16x128xf32>
    %c0_4 = arith.constant 0 : index
    %c0_5 = arith.constant 0 : index
    %9 = vector.load %arg3[%c0_4, %c0_5] : memref<8x128xf32, #tpu.memory_space<vmem>>, vector<8x128xf32>
    %10 = vector.shape_cast %8 : vector<16x128xf32> to vector<2x8x128xf32>
    %cst = arith.constant dense<0.000000e+00> : vector<8x128xf32>
    %11 = vector.multi_reduction <add>, %10, %cst [0] : vector<2x8x128xf32> to vector<8x128xf32>
    %12 = arith.addf %9, %11 : vector<8x128xf32>
    %c0_6 = arith.constant 0 : index
    %c0_7 = arith.constant 0 : index
    %13 = vector.load %arg3[%c0_6, %c0_7] : memref<8x128xf32, #tpu.memory_space<vmem>>, vector<8x128xf32>
    tpu.vector_store %arg3[%c0_6, %c0_7], %12 {strides = array<i32>} : memref<8x128xf32, #tpu.memory_space<vmem>>, vector<8x128xf32>,
    return
  }
  func.func @transform_0(%arg0: i32) -> (i32, i32) {
    %c0_i32 = arith.constant 0 : i32
    %c0_i32_0 = arith.constant 0 : i32
    return %arg0, %c0_i32 : i32, i32
  }
  func.func @transform_1(%arg0: i32) -> (i32, i32) {
    %c0_i32 = arith.constant 0 : i32
    %c0_i32_0 = arith.constant 0 : i32
    return %arg0, %c0_i32 : i32, i32
  }
  func.func @transform_2(%arg0: i32) -> (i32, i32) {
    %c0_i32 = arith.constant 0 : i32
    %c0_i32_0 = arith.constant 0 : i32
    %c0_i32_1 = arith.constant 0 : i32
    return %c0_i32, %c0_i32_0 : i32, i32
  }
}

</mosaic_0001>

<llo_original>
// kernel: rmsle_loss.1
$region0: #{rmsle_loss.1}
  #allocation0 [shape = 'u32[]', space=smem, size = 0x4, offset = 0x4, fixed_abs, tag = 'smem constant byte address 0x4 - core index']
  #allocation1 [shape = 'u32[72,128]{1,0:T(1,128)}', space=vmem, size = 0x9000, scoped, tag = 'internal scratch']
  %s0 = inlined_call_operand.vmem [shape: f32[16,128], index: 0, kind: input, shape index: {}]
  %s1 = inlined_call_operand.vmem [shape: f32[16,128], index: 1, kind: input, shape index: {}]
  %s2 = inlined_call_operand.vmem [shape: f32[8,128], index: 2, kind: output, shape index: {}]
  %s3 = sld [smem:[#allocation0]]
  $region22: #{rmsle_loss.1} parent=0
    _
  %s5 = ssub.s32 1, %s3
  %s6 = scalar_select 0, %s5, %s3
  // Predicated region
  $region2: #{rmsle_loss.1} parent=0 // pred_check
    _
  $region3: #{rmsle_loss.1} parent=0 // pred_check_branch
    %8 = sbr.rel (0) target = $region5
  $region4: #{rmsle_loss.1} parent=0 // pred_region
    _
  $region5: #{rmsle_loss.1} parent=0 // pred_fallthru
    _
  // Predicated region
  $region6: #{rmsle_loss.1} parent=0 // pred_check
    _
  $region7: #{rmsle_loss.1} parent=0 // pred_check_branch
    %10 = sbr.rel (0) target = $region9
  $region8: #{rmsle_loss.1} parent=0 // pred_region
    _
  $region9: #{rmsle_loss.1} parent=0 // pred_fallthru
    _
  %p11 = scmp.eq.s32.totalorder 0, 0
  // Predicated region
  $region10: #{rmsle_loss.1} parent=0 // pred_check
    %p12 = pneg %p11
  $region11: #{rmsle_loss.1} parent=0 // pred_check_branch
    %14 = sbr.rel (%p12) target = $region13
  $region12: #{rmsle_loss.1} parent=0 // pred_region
    %15 = vst [vmem:[%s2] sm:$0xff] 0.0
  $region13: #{rmsle_loss.1} parent=0 // pred_fallthru
    _
  %v16 = vld [vmem:[%s0] sm:$0xff]
  %v17 = vld [vmem:[%s0 + $0x8] sm:$0xff]
  %v18 = vld [vmem:[%s1] sm:$0xff]
  %v19 = vld [vmem:[%s1 + $0x8] sm:$0xff]
  %v20 = vadd.f32 %v16, 1.0
  %v21 = vlog2.pop %v20
  %v22 = vmul.f32 %v21, 0.6931472
  %v23 = vmul.f32 -0.5, %v16
  %v24 = vadd.f32 %v23, 1.0
  %v25 = vmul.f32 %v24, %v16
  %v26 = vand.u32 2147483647, %v16
  %vm27 = vcmp.lt.f32.partialorder %v26, 0.0004427343
  %v28 = vsel %vm27, %v25, %v22
  %v29 = vadd.f32 %v17, 1.0
  %v30 = vlog2.pop %v29
  %v31 = vmul.f32 %v30, 0.6931472
  %v32 = vmul.f32 -0.5, %v17
  %v33 = vadd.f32 %v32, 1.0
  %v34 = vmul.f32 %v33, %v17
  %v35 = vand.u32 2147483647, %v17
  %vm36 = vcmp.lt.f32.partialorder %v35, 0.0004427343
  %v37 = vsel %vm36, %v34, %v31
  %v38 = vadd.f32 %v18, 1.0
  %v39 = vlog2.pop %v38
  %v40 = vmul.f32 %v39, 0.6931472
  %v41 = vmul.f32 -0.5, %v18
  %v42 = vadd.f32 %v41, 1.0
  %v43 = vmul.f32 %v42, %v18
  %v44 = vand.u32 2147483647, %v18
  %vm45 = vcmp.lt.f32.partialorder %v44, 0.0004427343
  %v46 = vsel %vm45, %v43, %v40
  %v47 = vadd.f32 %v19, 1.0
  %v48 = vlog2.pop %v47
  %v49 = vmul.f32 %v48, 0.6931472
  %v50 = vmul.f32 -0.5, %v19
  %v51 = vadd.f32 %v50, 1.0
  %v52 = vmul.f32 %v51, %v19
  %v53 = vand.u32 2147483647, %v19
  %vm54 = vcmp.lt.f32.partialorder %v53, 0.0004427343
  %v55 = vsel %vm54, %v52, %v49
  %v56 = vsub.f32 %v28, %v46
  %v57 = vsub.f32 %v37, %v55
  %v58 = vmul.f32 %v56, %v56
  %v59 = vmul.f32 %v57, %v57
  %v60 = vld [vmem:[%s2] sm:$0xff]
  %v61 = vadd.f32 %v58, %v59
  %v62 = vadd.f32 %v60, %v61
  %63 = vst [vmem:[%s2] sm:$0xff] %v62
  // Predicated region
  $region14: #{rmsle_loss.1} parent=0 // pred_check
    _
  $region15: #{rmsle_loss.1} parent=0 // pred_check_branch
    %65 = sbr.rel (0) target = $region17
  $region16: #{rmsle_loss.1} parent=0 // pred_region
    _
  $region17: #{rmsle_loss.1} parent=0 // pred_fallthru
    _
  // Predicated region
  $region18: #{rmsle_loss.1} parent=0 // pred_check
    _
  $region19: #{rmsle_loss.1} parent=0 // pred_check_branch
    %67 = sbr.rel (0) target = $region21
  $region20: #{rmsle_loss.1} parent=0 // pred_region
    _
  $region21: #{rmsle_loss.1} parent=0 // pred_fallthru
    _

</llo_original>
